<compile_context>
chip_gen: v5e
topology: v5e:2x2
jax: 0.10.0
libtpu: 0.0.40
codegen_flags: <defaults>
</compile_context>

<pallas_src>
import functools

import jax
import jax.numpy as jnp
from jax.experimental import pallas as pl
from jax.experimental.pallas import tpu as pltpu


def _pow_int(x, n):
    """x ** n for a static positive int n via exponentiation-by-squaring.

    Uses plain VPU multiplies (2 muls for n=3) instead of exp(n*log(x)).
    """
    acc = None
    base = x
    while n > 0:
        if n & 1:
            acc = base if acc is None else acc * base
        n >>= 1
        if n:
            base = base * base
    return acc


def _gem_kernel(x_ref, o_ref, *, p, p_int, eps, inv_hw):
    # x_ref: (row_tile, H*W)  ->  o_ref: (row_tile, 1)
    x = x_ref[...].astype(jnp.float32)           # f32 accumulation (bf16-safe)
    xc = jnp.maximum(x, eps)                     # clamp(min=eps)
    if p_int is not None:
        xp = _pow_int(xc, p_int)                 # VPU fast path (p=3 -> x*x*x)
    else:
        xp = xc ** p                             # general float exponent (EUP)
    mean = jnp.sum(xp, axis=-1, keepdims=True) * inv_hw   # avg over full H*W
    out = mean ** (1.0 / p)                      # per-row only; negligible
    o_ref[...] = out.astype(o_ref.dtype)


def _choose_row_tile(rows, hw_lanes, itemsize):
    """Pick a sublane-aligned row tile from the VMEM layout footprint."""
    if rows < 8:
        return rows                              # block == full dim is legal
    bytes_per_row = hw_lanes * itemsize
    # ~8 MiB per input block; double-buffered -> ~16-18 MiB scoped VMEM.
    # Fits v5e/v6e (128 MiB physical) and v7x (64 MiB physical) comfortably.
    budget_per_block = 8 * 1024 * 1024
    tile = max(8, (budget_per_block // bytes_per_row) // 8 * 8)
    if tile >= rows:
        # Everything fits in one block: still aim for >=2 grid steps so the
        # "parallel" rows axis can split across v7x's two TensorCores.
        tile = max(8, (rows // 2) // 8 * 8)
    return min(tile, rows)


def gem_pallas(x, p=3.0, eps=1e-6):
    """GeM pooling. x: (N, C, H, W) -> (N, C, 1, 1)."""
    N, C, H, W = x.shape
    rows = N * C
    hw = H * W
    x2 = x.reshape(rows, hw)                     # free reshape of contiguous NCHW

    itemsize = jnp.dtype(x.dtype).itemsize
    hw_lanes = pl.cdiv(hw, 128) * 128            # lane-padded VMEM footprint
    row_tile = _choose_row_tile(rows, hw_lanes, itemsize)
    grid = (pl.cdiv(rows, row_tile),)

    p_f = float(p)
    p_round = round(p_f)
    p_int = int(p_round) if (p_f == p_round and 1 <= p_round <= 32) else None

    kernel = functools.partial(
        _gem_kernel, p=p_f, p_int=p_int, eps=float(eps), inv_hw=1.0 / float(hw)
    )

    # Raise scoped VMEM to cover the double-buffered input block (+ headroom).
    block_bytes = row_tile * hw_lanes * itemsize
    vmem_limit = int(min(64 << 20, max(2 * block_bytes + (2 << 20), 16 << 20)))

    cost = pl.CostEstimate(
        flops=4 * rows * hw,
        transcendentals=(2 * rows) if p_int is not None else 2 * rows * (hw + 1),
        bytes_accessed=rows * hw * itemsize + rows * itemsize,
    )

    out2 = pl.pallas_call(
        kernel,
        out_shape=jax.ShapeDtypeStruct((rows, 1), x.dtype),
        grid_spec=pltpu.PrefetchScalarGridSpec(
            num_scalar_prefetch=0,
            grid=grid,
            in_specs=[pl.BlockSpec((row_tile, hw), lambda i: (i, 0))],
            out_specs=pl.BlockSpec((row_tile, 1), lambda i: (i, 0)),
        ),
        compiler_params=pltpu.CompilerParams(
            dimension_semantics=("parallel",),
            vmem_limit_bytes=vmem_limit,
        ),
        cost_estimate=cost,
    )(x2)

    return out2.reshape(N, C, 1, 1)


def gem_reference(x, p=3.0, eps=1e-6):
    xc = jnp.maximum(x.astype(jnp.float32), eps) ** p
    mean = jnp.mean(xc, axis=(-2, -1), keepdims=True)
    return (mean ** (1.0 / p)).astype(x.dtype)


if __name__ == "__main__":
    # GeM with defaults: p=3 (non-trainable), eps=1e-6 -> no learned params.
    key = jax.random.PRNGKey(0)
    N, C, H, W = 2, 4, 16, 16
    x = jax.random.normal(key, (N, C, H, W), dtype=jnp.float32)

    out = gem_pallas(x, p=3.0, eps=1e-6)
    out = jax.block_until_ready(out)

    ref = gem_reference(x, p=3.0, eps=1e-6)
    assert out.shape == (N, C, 1, 1), out.shape
    assert jnp.allclose(out, ref, atol=1e-5, rtol=1e-5), (
        float(jnp.max(jnp.abs(out - ref)))
    )
    print("KERNEL_OK")
</pallas_src>

<mosaic_0001>
module attributes {stable_mosaic.version = 11 : i64} {
  func.func @_gem_kernel(%arg0: i32, %arg1: memref<8x256xf32, #tpu.memory_space<vmem>>, %arg2: memref<8x1xf32, #tpu.memory_space<vmem>>) attributes {dimension_semantics = [#tpu.dimension_semantics<parallel>], iteration_bounds = array<i64: 1>, scalar_prefetch = 0 : i64, scratch_operands = 0 : i64, tpu.core_type = #tpu.core_type<tc>, window_params = [{transform_indices = @transform_0, window_bounds = array<i64: 8, 256>}, {transform_indices = @transform_1, window_bounds = array<i64: 8, 1>}]} {
    %c0 = arith.constant 0 : index
    %c0_0 = arith.constant 0 : index
    %0 = vector.load %arg1[%c0, %c0_0] : memref<8x256xf32, #tpu.memory_space<vmem>>, vector<8x256xf32>
    %cst = arith.constant 9.99999997E-7 : f32
    %1 = vector.broadcast %cst : f32 to vector<8x256xf32>
    %2 = arith.maximumf %0, %1 : vector<8x256xf32>
    %3 = arith.mulf %2, %2 : vector<8x256xf32>
    %4 = arith.mulf %2, %3 : vector<8x256xf32>
    %cst_1 = arith.constant dense<0.000000e+00> : vector<8xf32>
    %5 = vector.multi_reduction <add>, %4, %cst_1 [1] : vector<8x256xf32> to vector<8xf32>
    %6 = vector.shape_cast %5 : vector<8xf32> to vector<8x1xf32>
    %cst_2 = arith.constant 3.906250e-03 : f32
    %7 = vector.broadcast %cst_2 : f32 to vector<8x1xf32>
    %8 = arith.mulf %6, %7 : vector<8x1xf32>
    %cst_3 = arith.constant 0.333333343 : f32
    %9 = vector.broadcast %cst_3 : f32 to vector<8x1xf32>
    %10 = math.powf %8, %9 : vector<8x1xf32>
    %c0_4 = arith.constant 0 : index
    %c0_5 = arith.constant 0 : index
    %11 = vector.load %arg2[%c0_4, %c0_5] : memref<8x1xf32, #tpu.memory_space<vmem>>, vector<8x1xf32>
    tpu.vector_store %arg2[%c0_4, %c0_5], %10 {strides = array<i32>} : memref<8x1xf32, #tpu.memory_space<vmem>>, vector<8x1xf32>,
    return
  }
  func.func @transform_0(%arg0: i32) -> (i32, i32) {
    %c0_i32 = arith.constant 0 : i32
    %c0_i32_0 = arith.constant 0 : i32
    return %arg0, %c0_i32 : i32, i32
  }
  func.func @transform_1(%arg0: i32) -> (i32, i32) {
    %c0_i32 = arith.constant 0 : i32
    %c0_i32_0 = arith.constant 0 : i32
    return %arg0, %c0_i32 : i32, i32
  }
}

</mosaic_0001>

<llo_original>
// kernel: tpu_custom_call.1
$region0: #{tpu_custom_call.1}
  #allocation0 [shape = 'u32[]', space=smem, size = 0x4, offset = 0x4, fixed_abs, tag = 'smem constant byte address 0x4 - core index']
  #allocation1 [shape = 'u32[72,128]{1,0:T(1,128)}', space=vmem, size = 0x9000, scoped, tag = 'internal scratch']
  %s0 = inlined_call_operand.hbm [shape: f32[8,256], index: 0, kind: input, shape index: {}]
  %s1 = inlined_call_operand.vmem [shape: f32[8,1], index: 1, kind: output, shape index: {}]
  %s2 = sld [smem:[#allocation0]]
  $region18: #{tpu_custom_call.1} parent=0
    _
  %s4 = ssub.s32 1, %s2
  %s5 = scalar_select 0, %s4, %s2
  $region1: #{tpu_custom_call.1} parent=0
    #allocation2 [shape = 'u8[8192]{0}', space=vmem, size = 0x2000, scoped, tag = 'input window, operand 0, single buffered']
    #allocation3 [shape = 's32[1]{0}', space=sflag, size = 0x4, scoped, tag = 'scoped memory for tpu_custom_call.1']
    %6 = vsyncpa [#allocation3], 0
    // Predicated region
    $region2: #{tpu_custom_call.1} parent=1 // pred_check
      _
    $region3: #{tpu_custom_call.1} parent=1 // pred_check_branch
      %8 = sbr.rel (0) target = $region5
    $region4: #{tpu_custom_call.1} parent=1 // pred_region
      %10 = vsyncadd [#allocation3], 0
      %s12 = sshll.u32 %s0, 4
      %s13 = int_to_ptr.hbm [resolvable:$true] %s12
      %s14 = sshll.u32 [#allocation2], 4
      %s15 = int_to_ptr.vmem [resolvable:$true] %s14
      %17 = dma.hbm_to_vmem [thread:$0]  %s13, 256, %s15, [#allocation3]
    $region5: #{tpu_custom_call.1} parent=1 // pred_fallthru
      _
    // Predicated region
    $region6: #{tpu_custom_call.1} parent=1 // pred_check
      _
    $region7: #{tpu_custom_call.1} parent=1 // pred_check_branch
      %19 = sbr.rel (0) target = $region9
    $region8: #{tpu_custom_call.1} parent=1 // pred_region
      %21 = dma.done [#allocation3], 256
    $region9: #{tpu_custom_call.1} parent=1 // pred_fallthru
      _
    %v22 = vld [vmem:[#allocation2] sm:$0xff]
    %v23 = vld [vmem:[#allocation2 + $0x8] sm:$0xff]
    %v24 = vmax.f32 %v22, 1e-06
    %v25 = vmax.f32 %v23, 1e-06
    %v26 = vmul.f32 %v24, %v24
    %v27 = vmul.f32 %v25, %v25
    %v28 = vmul.f32 %v24, %v26
    %v29 = vmul.f32 %v25, %v27
    %v30 = vadd.f32 %v28, %v29
    %31 = vadd.xlane.f32.xlu0 %v30
    %v32 = vpop.xlane.xlu0 %31
    %v33 = vmul.f32 %v32, 0.00390625
    %v34 = vpow.f32 %v33, 0.33333334
    %vm35 = vcmask 7168
    %36 = vst.msk [vmem:[%s1] sm:$0xff] %vm35, %v34
    // Predicated region
    $region10: #{tpu_custom_call.1} parent=1 // pred_check
      _
    $region11: #{tpu_custom_call.1} parent=1 // pred_check_branch
      %38 = sbr.rel (0) target = $region13
    $region12: #{tpu_custom_call.1} parent=1 // pred_region
      _
    $region13: #{tpu_custom_call.1} parent=1 // pred_fallthru
      _
    // Predicated region
    $region14: #{tpu_custom_call.1} parent=1 // pred_check
      _
    $region15: #{tpu_custom_call.1} parent=1 // pred_check_branch
      %40 = sbr.rel (0) target = $region17
    $region16: #{tpu_custom_call.1} parent=1 // pred_region
      _
    $region17: #{tpu_custom_call.1} parent=1 // pred_fallthru
      _
    %41 = vsyncpa [#allocation3], 1

</llo_original>
